<compile_context>
chip_gen: v6e
topology: v6e:2x2x1
jax: 0.10.0
libtpu: 0.0.40
codegen_flags: <defaults>
</compile_context>

<pallas_src>
import jax
import jax.numpy as jnp
from jax.experimental import pallas as pl
from jax.experimental.pallas import tpu as pltpu

LANE = 128          # TPU lane width (last dim)
HIDDEN = 256        # fixed by the module spec


def _round_up(n, m):
    return ((n + m - 1) // m) * m


def _encoder_kernel(x_ref, w1_ref, b1_ref, w2_ref, b2_ref, o_ref):
    # x_ref : (TM, Din_p)      VMEM (f32 or bf16)
    # w1_ref: (Din_p, H)       VMEM (f32 or bf16)
    # b1_ref: (1, H)           VMEM f32
    # w2_ref: (H, Dout_p)      VMEM (f32 or bf16)
    # b2_ref: (1, Dout_p)      VMEM f32
    # o_ref : (TM, Dout_p)     VMEM f32
    x = x_ref[...]
    # Linear 1 + ReLU: MXU matmul with f32 accumulation, bias + ReLU on the VPU.
    h = jnp.dot(x, w1_ref[...], preferred_element_type=jnp.float32)
    h = jnp.maximum(h + b1_ref[...], 0.0)
    # Linear 2 + ReLU (cast hidden back to the matmul dtype for the MXU).
    y = jnp.dot(h.astype(w2_ref.dtype), w2_ref[...],
                preferred_element_type=jnp.float32)
    y = jnp.maximum(y + b2_ref[...], 0.0)
    o_ref[...] = y.astype(o_ref.dtype)


def _vmem_estimate(tile_m, d_in_p, hid_p, d_out_p, in_bytes, out_bytes):
    # weights/biases and x/out tiles double-buffered, plus the f32 hidden
    # intermediate.
    weights = 2 * ((d_in_p * hid_p + hid_p * d_out_p) * in_bytes
                   + (hid_p + d_out_p) * 4)
    io = 2 * tile_m * d_in_p * in_bytes + 2 * tile_m * d_out_p * out_bytes
    hidden = tile_m * hid_p * 4
    return weights + io + hidden


def tabular_encoder(x, w1, b1, w2, b2, *, tile_m=None,
                    compute_dtype=jnp.float32):
    """Fused MLP forward.

    x : (B, D_in) float32
    w1: (D_in, 256), b1: (256,)
    w2: (256, D_out), b2: (D_out,)
    compute_dtype: dtype used for the matmul operands (f32 or bf16);
                   accumulation, bias, ReLU and output stay f32.
    returns (B, D_out) float32
    """
    B, d_in = x.shape
    d_in_w, hidden = w1.shape
    hidden_w, d_out = w2.shape
    assert d_in_w == d_in and hidden_w == hidden

    out_dtype = x.dtype
    in_bytes = jnp.dtype(compute_dtype).itemsize
    out_bytes = jnp.dtype(out_dtype).itemsize

    # Pad feature dims to full lanes: lane-dense input DMA, full-K MXU passes,
    # unmasked (lane-dense) output stores.
    d_in_p = _round_up(d_in, LANE)
    hid_p = _round_up(hidden, LANE)      # 256 already
    d_out_p = _round_up(d_out, LANE)

    # --- batch tile selection -------------------------------------------------
    sub = 16 if jnp.dtype(compute_dtype) == jnp.dtype(jnp.bfloat16) else 8
    if tile_m is None:
        tile_m = 512                      # big tiles ~ HBM-roofline efficient
    tile_m = max(_round_up(tile_m, sub), sub)
    tile_m = min(tile_m, _round_up(B, sub))
    # Shrink until the working set fits comfortably under the smallest
    # scoped-VMEM default (v5e: 16 MiB); also keeps v7x's 64 MiB physical
    # VMEM happy.
    budget = 12 * 1024 * 1024
    while tile_m > sub and _vmem_estimate(tile_m, d_in_p, hid_p, d_out_p,
                                          in_bytes, out_bytes) > budget:
        tile_m = max(_round_up(tile_m // 2, sub), sub)
    # TODO(synk): for very wide tabular inputs (d_in ~ 10k+) the resident w1
    # block alone can exceed the VMEM budget; tile w1 along K with a reduction
    # grid axis instead of loading it whole.

    B_p = _round_up(B, tile_m)
    grid = (B_p // tile_m,)

    # --- pad + cast operands (zero padding is exact: contributes 0 to the dot) -
    x_p = jnp.pad(x.astype(compute_dtype), ((0, B_p - B), (0, d_in_p - d_in)))
    w1_p = jnp.pad(w1.astype(compute_dtype),
                   ((0, d_in_p - d_in), (0, hid_p - hidden)))
    b1_p = jnp.pad(b1.astype(jnp.float32), (0, hid_p - hidden)).reshape(1, hid_p)
    w2_p = jnp.pad(w2.astype(compute_dtype),
                   ((0, hid_p - hidden), (0, d_out_p - d_out)))
    b2_p = jnp.pad(b2.astype(jnp.float32), (0, d_out_p - d_out)).reshape(1, d_out_p)

    flops = 2 * B_p * (d_in_p * hid_p + hid_p * d_out_p)
    bytes_accessed = (B_p * d_in_p * in_bytes
                      + (d_in_p * hid_p + hid_p * d_out_p) * in_bytes
                      + (hid_p + d_out_p) * 4
                      + B_p * d_out_p * out_bytes)

    # Constant index_maps for weights/biases: the same block is revisited every
    # grid step, so the pipeline does not re-DMA them between iterations.
    in_specs = [
        pl.BlockSpec((tile_m, d_in_p), lambda i: (i, 0)),      # x tile
        pl.BlockSpec((d_in_p, hid_p), lambda i: (0, 0)),       # w1 (resident)
        pl.BlockSpec((1, hid_p), lambda i: (0, 0)),            # b1
        pl.BlockSpec((hid_p, d_out_p), lambda i: (0, 0)),      # w2 (resident)
        pl.BlockSpec((1, d_out_p), lambda i: (0, 0)),          # b2
    ]

    out_p = pl.pallas_call(
        _encoder_kernel,
        out_shape=jax.ShapeDtypeStruct((B_p, d_out_p), out_dtype),
        grid_spec=pltpu.PrefetchScalarGridSpec(
            num_scalar_prefetch=0,
            grid=grid,
            in_specs=in_specs,
            out_specs=pl.BlockSpec((tile_m, d_out_p), lambda i: (i, 0)),
        ),
        compiler_params=pltpu.CompilerParams(
            dimension_semantics=("parallel",),
        ),
        cost_estimate=pl.CostEstimate(
            flops=flops, transcendentals=0, bytes_accessed=bytes_accessed),
    )(x_p, w1_p, b1_p, w2_p, b2_p)

    return out_p[:B, :d_out]


def init_params(key, input_dim, output_dim, hidden=HIDDEN):
    """Parameters matching nn.Linear's default init, transposed to (in, out)."""
    k1, k2, k3, k4 = jax.random.split(key, 4)
    bound1 = 1.0 / (input_dim ** 0.5)
    bound2 = 1.0 / (hidden ** 0.5)
    w1_t = jax.random.uniform(k1, (hidden, input_dim), jnp.float32, -bound1, bound1)
    b1 = jax.random.uniform(k2, (hidden,), jnp.float32, -bound1, bound1)
    w2_t = jax.random.uniform(k3, (output_dim, hidden), jnp.float32, -bound2, bound2)
    b2 = jax.random.uniform(k4, (output_dim,), jnp.float32, -bound2, bound2)
    return w1_t.T, b1, w2_t.T, b2


if __name__ == "__main__":
    key = jax.random.PRNGKey(0)
    input_dim, output_dim = 32, 64
    kx, kp = jax.random.split(key)
    w1, b1, w2, b2 = init_params(kp, input_dim, output_dim)

    def ref_fwd(xx):
        return jnp.maximum(jnp.maximum(xx @ w1 + b1, 0.0) @ w2 + b2, 0.0)

    # 1) f32 path, multi-step pipelined grid (64 rows, 16-row tiles -> 4 steps).
    x = jax.random.normal(kx, (64, input_dim), jnp.float32)
    out = jax.block_until_ready(tabular_encoder(x, w1, b1, w2, b2, tile_m=16))
    assert out.shape == (64, output_dim)
    assert jnp.allclose(out, ref_fwd(x), atol=1e-5, rtol=1e-5)

    # 2) f32 path, ragged batch (exercises row/col zero-padding + auto tile_m).
    x2 = jax.random.normal(kx, (10, input_dim), jnp.float32)
    out2 = jax.block_until_ready(tabular_encoder(x2, w1, b1, w2, b2))
    assert out2.shape == (10, output_dim)
    assert jnp.allclose(out2, ref_fwd(x2), atol=1e-5, rtol=1e-5)

    # 3) bf16 matmul operands (f32 accumulate / bias / ReLU). Compare against a
    #    reference applying the same casts.
    out3 = jax.block_until_ready(
        tabular_encoder(x, w1, b1, w2, b2, tile_m=16, compute_dtype=jnp.bfloat16))
    hb = jnp.maximum(
        jnp.dot(x.astype(jnp.bfloat16), w1.astype(jnp.bfloat16),
                preferred_element_type=jnp.float32) + b1, 0.0)
    ref_bf = jnp.maximum(
        jnp.dot(hb.astype(jnp.bfloat16), w2.astype(jnp.bfloat16),
                preferred_element_type=jnp.float32) + b2, 0.0)
    assert out3.shape == (64, output_dim)
    assert jnp.allclose(out3, ref_bf, atol=1e-2, rtol=1e-2)

    print("KERNEL_OK")
</pallas_src>

<mosaic_0001>
module attributes {stable_mosaic.version = 11 : i64} {
  func.func @_encoder_kernel(%arg0: i32, %arg1: memref<16x128xf32, #tpu.memory_space<vmem>>, %arg2: memref<128x256xf32, #tpu.memory_space<vmem>>, %arg3: memref<1x256xf32, #tpu.memory_space<vmem>>, %arg4: memref<256x128xf32, #tpu.memory_space<vmem>>, %arg5: memref<1x128xf32, #tpu.memory_space<vmem>>, %arg6: memref<16x128xf32, #tpu.memory_space<vmem>>) attributes {dimension_semantics = [#tpu.dimension_semantics<parallel>], iteration_bounds = array<i64: 4>, scalar_prefetch = 0 : i64, scratch_operands = 0 : i64, tpu.core_type = #tpu.core_type<tc>, window_params = [{transform_indices = @transform_0, window_bounds = array<i64: 16, 128>}, {pipeline_mode = #tpu.pipeline_mode<synchronous>, transform_indices = @transform_1, window_bounds = array<i64: 128, 256>}, {pipeline_mode = #tpu.pipeline_mode<synchronous>, transform_indices = @transform_2, window_bounds = array<i64: 1, 256>}, {pipeline_mode = #tpu.pipeline_mode<synchronous>, transform_indices = @transform_3, window_bounds = array<i64: 256, 128>}, {pipeline_mode = #tpu.pipeline_mode<synchronous>, transform_indices = @transform_4, window_bounds = array<i64: 1, 128>}, {transform_indices = @transform_5, window_bounds = array<i64: 16, 128>}]} {
    %c0 = arith.constant 0 : index
    %c0_0 = arith.constant 0 : index
    %0 = vector.load %arg1[%c0, %c0_0] : memref<16x128xf32, #tpu.memory_space<vmem>>, vector<16x128xf32>
    %c0_1 = arith.constant 0 : index
    %c0_2 = arith.constant 0 : index
    %1 = vector.load %arg2[%c0_1, %c0_2] : memref<128x256xf32, #tpu.memory_space<vmem>>, vector<128x256xf32>
    %cst = arith.constant dense<0.000000e+00> : vector<16x256xf32>
    %2 = tpu.matmul %0, %1, %cst {dimension_numbers = #tpu.dot_dimension_numbers<[1], [0], [0], [1], [0, 0, 1, 1], [], []>} : vector<16x128xf32>, vector<128x256xf32>, vector<16x256xf32> -> vector<16x256xf32>
    %c0_3 = arith.constant 0 : index
    %c0_4 = arith.constant 0 : index
    %3 = vector.load %arg3[%c0_3, %c0_4] : memref<1x256xf32, #tpu.memory_space<vmem>>, vector<1x256xf32>
    %4 = vector.broadcast %3 : vector<1x256xf32> to vector<16x256xf32>
    %5 = arith.addf %2, %4 : vector<16x256xf32>
    %cst_5 = arith.constant 0.000000e+00 : f32
    %6 = vector.broadcast %cst_5 : f32 to vector<16x256xf32>
    %7 = arith.maximumf %5, %6 : vector<16x256xf32>
    %c0_6 = arith.constant 0 : index
    %c0_7 = arith.constant 0 : index
    %8 = vector.load %arg4[%c0_6, %c0_7] : memref<256x128xf32, #tpu.memory_space<vmem>>, vector<256x128xf32>
    %cst_8 = arith.constant dense<0.000000e+00> : vector<16x128xf32>
    %9 = tpu.matmul %7, %8, %cst_8 {dimension_numbers = #tpu.dot_dimension_numbers<[1], [0], [0], [1], [0, 0, 1, 1], [], []>} : vector<16x256xf32>, vector<256x128xf32>, vector<16x128xf32> -> vector<16x128xf32>
    %c0_9 = arith.constant 0 : index
    %c0_10 = arith.constant 0 : index
    %10 = vector.load %arg5[%c0_9, %c0_10] : memref<1x128xf32, #tpu.memory_space<vmem>>, vector<1x128xf32>
    %11 = vector.broadcast %10 : vector<1x128xf32> to vector<16x128xf32>
    %12 = arith.addf %9, %11 : vector<16x128xf32>
    %cst_11 = arith.constant 0.000000e+00 : f32
    %13 = vector.broadcast %cst_11 : f32 to vector<16x128xf32>
    %14 = arith.maximumf %12, %13 : vector<16x128xf32>
    %c0_12 = arith.constant 0 : index
    %c0_13 = arith.constant 0 : index
    %15 = vector.load %arg6[%c0_12, %c0_13] : memref<16x128xf32, #tpu.memory_space<vmem>>, vector<16x128xf32>
    tpu.vector_store %arg6[%c0_12, %c0_13], %14 {strides = array<i32>} : memref<16x128xf32, #tpu.memory_space<vmem>>, vector<16x128xf32>,
    return
  }
  func.func @transform_0(%arg0: i32) -> (i32, i32) {
    %c0_i32 = arith.constant 0 : i32
    %c0_i32_0 = arith.constant 0 : i32
    return %arg0, %c0_i32 : i32, i32
  }
  func.func @transform_1(%arg0: i32) -> (i32, i32) {
    %c0_i32 = arith.constant 0 : i32
    %c0_i32_0 = arith.constant 0 : i32
    %c0_i32_1 = arith.constant 0 : i32
    return %c0_i32, %c0_i32_0 : i32, i32
  }
  func.func @transform_2(%arg0: i32) -> (i32, i32) {
    %c0_i32 = arith.constant 0 : i32
    %c0_i32_0 = arith.constant 0 : i32
    %c0_i32_1 = arith.constant 0 : i32
    return %c0_i32, %c0_i32_0 : i32, i32
  }
  func.func @transform_3(%arg0: i32) -> (i32, i32) {
    %c0_i32 = arith.constant 0 : i32
    %c0_i32_0 = arith.constant 0 : i32
    %c0_i32_1 = arith.constant 0 : i32
    return %c0_i32, %c0_i32_0 : i32, i32
  }
  func.func @transform_4(%arg0: i32) -> (i32, i32) {
    %c0_i32 = arith.constant 0 : i32
    %c0_i32_0 = arith.constant 0 : i32
    %c0_i32_1 = arith.constant 0 : i32
    return %c0_i32, %c0_i32_0 : i32, i32
  }
  func.func @transform_5(%arg0: i32) -> (i32, i32) {
    %c0_i32 = arith.constant 0 : i32
    %c0_i32_0 = arith.constant 0 : i32
    return %arg0, %c0_i32 : i32, i32
  }
}

</mosaic_0001>

<llo_original>
// kernel: tpu_custom_call.1
$region0: #{tpu_custom_call.1}
  #allocation0 [shape = 'u32[]', space=smem, size = 0x4, offset = 0x4, fixed_abs, tag = 'smem constant byte address 0x4 - core index']
  #allocation1 [shape = 'u32[144,128]{1,0:T(1,128)}', space=vmem, size = 0x12000, scoped, tag = 'internal scratch']
  %s0 = inlined_call_operand.hbm [shape: f32[64,128], index: 0, kind: input, shape index: {}]
  %s1 = inlined_call_operand.hbm [shape: f32[128,256], index: 1, kind: input, shape index: {}]
  %s2 = inlined_call_operand.vmem [shape: f32[1,256], index: 2, kind: input, shape index: {}]
  %s3 = inlined_call_operand.hbm [shape: f32[256,128], index: 3, kind: input, shape index: {}]
  %s4 = inlined_call_operand.vmem [shape: f32[1,128], index: 4, kind: input, shape index: {}]
  %s5 = inlined_call_operand.hbm [shape: f32[64,128], index: 5, kind: output, shape index: {}]
  %s6 = sld [smem:[#allocation0]]
  $region65: #{tpu_custom_call.1} parent=0
    _
  %s8 = ssub.s32 1, %s6
  %s9 = scalar_select 0, %s8, %s6
  $region1: #{tpu_custom_call.1} parent=0
    #allocation2 [shape = 'u8[16384]{0}', space=vmem, size = 0x4000, scoped, tag = 'input window, operand 0']
    #allocation3 [shape = 's32[2]{0}', space=sflag, size = 0x8, scoped, tag = 'scoped memory for tpu_custom_call.1']
    #allocation4 [shape = 's32[2]{0}', space=sflag, size = 0x8, scoped, tag = 'scoped memory for tpu_custom_call.1']
    #allocation5 [shape = 'u8[131072]{0}', space=vmem, size = 0x20000, scoped, tag = 'input window, operand 1, single buffered']
    #allocation6 [shape = 's32[1]{0}', space=sflag, size = 0x4, scoped, tag = 'scoped memory for tpu_custom_call.1']
    #allocation7 [shape = 'u8[131072]{0}', space=vmem, size = 0x20000, scoped, tag = 'input window, operand 3, single buffered']
    #allocation8 [shape = 'u8[16384]{0}', space=vmem, size = 0x4000, scoped, tag = 'output window, operand 0']
    %10 = vsyncpa [#allocation3], 0
    %s11 = scalar_lea.sflag [#allocation3], 1
    %12 = vsyncpa %s11, 0
    %13 = vsyncpa [#allocation6], 0
    %14 = vsyncpa [#allocation4], 0
    %s15 = scalar_lea.sflag [#allocation4], 1
    %16 = vsyncpa %s15, 0
    loop: start=0, step=1, limit=6
    $region2: #{tpu_custom_call.1} parent=1 // loop_pre_header
      _
    $region3: #{tpu_custom_call.1} parent=1 // loop_header
      %s18 = sphi 0, %s22
      %p19 = scmp.ge.s32.totalorder %s18, 6
      %s28 = sphi 0, %s30
      %s31 = sphi 0, %s28
      %s32 = sphi 0, %s31
      %s48 = sphi 0, %s32
      %s52 = sphi 0, %s52
      %s54 = sphi 0, %s52
      %s55 = sphi 0, %s54
      %s69 = sphi 0, %s55
      %s73 = sphi 0, %s73
      %s75 = sphi 0, %s73
      %s76 = sphi 0, %s75
      %s90 = sphi 0, %s76
      %s94 = sphi 0, %s94
      %s96 = sphi 0, %s94
      %s97 = sphi 0, %s96
      %s111 = sphi 0, %s97
      %s115 = sphi 0, %s115
      %s117 = sphi 0, %s115
      %s118 = sphi 0, %s117
      %s132 = sphi 0, %s118
      %s138 = sphi 0, %s140
      %s141 = sphi 0, %s138
      %s142 = sphi 0, %s141
      %s158 = sphi 0, %s142
    $region4: #{tpu_custom_call.1} parent=1 // loop_header_branch
      %21 = sbr.rel (%p19) target = $region8
    $region5: #{tpu_custom_call.1} parent=1 // loop_body
      %s23 = ssub.s32 %s18, 1
      %s24 = ssub.s32 %s18, 2
      %s25 = sadd.s32 %s18, 1
      %s26 = ssub.s32 %s18, %s25
      %p27 = scmp.eq.s32.totalorder %s26, 0
      %s29 = sadd.s32 %s28, 1
      %s30 = scalar_select %p27, %s28, %s29
      %p33 = pneg %p27
      %p34 = scmp.eq.s32.totalorder %s18, 3
      %p35 = por %p33, %p34
      %p36 = scmp.ne.s32.totalorder %s28, %s31
      %p37 = scmp.eq.s32.totalorder %s18, 0
      %p38 = por %p36, %p37
      %p39 = scmp.ne.s32.totalorder %s28, %s31
      %p40 = scmp.eq.s32.totalorder %s23, 3
      %p41 = por %p39, %p40
      %p42 = scmp.ne.s32.totalorder %s31, %s32
      %p43 = scmp.eq.s32.totalorder %s23, 0
      %p44 = por %p42, %p43
      %p45 = scmp.ne.s32.totalorder %s31, %s32
      %p46 = scmp.eq.s32.totalorder %s24, 3
      %p47 = por %p45, %p46
      %p49 = scmp.ne.s32.totalorder %s32, %s48
      %p50 = scmp.eq.s32.totalorder %s24, 0
      %p51 = por %p49, %p50
      %s53 = sadd.s32 %s52, 1
      %p56 = scmp.eq.s32.totalorder %s18, 3
      %p57 = scmp.ne.s32.totalorder %s52, %s54
      %p58 = scmp.eq.s32.totalorder %s18, 0
      %p59 = por %p57, %p58
      %p60 = scmp.ne.s32.totalorder %s52, %s54
      %p61 = scmp.eq.s32.totalorder %s23, 3
      %p62 = por %p60, %p61
      %p63 = scmp.ne.s32.totalorder %s54, %s55
      %p64 = scmp.eq.s32.totalorder %s23, 0
      %p65 = por %p63, %p64
      %p66 = scmp.ne.s32.totalorder %s54, %s55
      %p67 = scmp.eq.s32.totalorder %s24, 3
      %p68 = por %p66, %p67
      %p70 = scmp.ne.s32.totalorder %s55, %s69
      %p71 = scmp.eq.s32.totalorder %s24, 0
      %p72 = por %p70, %p71
      %s74 = sadd.s32 %s73, 1
      %p77 = scmp.eq.s32.totalorder %s18, 3
      %p78 = scmp.ne.s32.totalorder %s73, %s75
      %p79 = scmp.eq.s32.totalorder %s18, 0
      %p80 = por %p78, %p79
      %p81 = scmp.ne.s32.totalorder %s73, %s75
      %p82 = scmp.eq.s32.totalorder %s23, 3
      %p83 = por %p81, %p82
      %p84 = scmp.ne.s32.totalorder %s75, %s76
      %p85 = scmp.eq.s32.totalorder %s23, 0
      %p86 = por %p84, %p85
      %p87 = scmp.ne.s32.totalorder %s75, %s76
      %p88 = scmp.eq.s32.totalorder %s24, 3
      %p89 = por %p87, %p88
      %p91 = scmp.ne.s32.totalorder %s76, %s90
      %p92 = scmp.eq.s32.totalorder %s24, 0
      %p93 = por %p91, %p92
      %s95 = sadd.s32 %s94, 1
      %p98 = scmp.eq.s32.totalorder %s18, 3
      %p99 = scmp.ne.s32.totalorder %s94, %s96
      %p100 = scmp.eq.s32.totalorder %s18, 0
      %p101 = por %p99, %p100
      %p102 = scmp.ne.s32.totalorder %s94, %s96
      %p103 = scmp.eq.s32.totalorder %s23, 3
      %p104 = por %p102, %p103
      %p105 = scmp.ne.s32.totalorder %s96, %s97
      %p106 = scmp.eq.s32.totalorder %s23, 0
      %p107 = por %p105, %p106
      %p108 = scmp.ne.s32.totalorder %s96, %s97
      %p109 = scmp.eq.s32.totalorder %s24, 3
      %p110 = por %p108, %p109
      %p112 = scmp.ne.s32.totalorder %s97, %s111
      %p113 = scmp.eq.s32.totalorder %s24, 0
      %p114 = por %p112, %p113
      %s116 = sadd.s32 %s115, 1
      %p119 = scmp.eq.s32.totalorder %s18, 3
      %p120 = scmp.ne.s32.totalorder %s115, %s117
      %p121 = scmp.eq.s32.totalorder %s18, 0
      %p122 = por %p120, %p121
      %p123 = scmp.ne.s32.totalorder %s115, %s117
      %p124 = scmp.eq.s32.totalorder %s23, 3
      %p125 = por %p123, %p124
      %p126 = scmp.ne.s32.totalorder %s117, %s118
      %p127 = scmp.eq.s32.totalorder %s23, 0
      %p128 = por %p126, %p127
      %p129 = scmp.ne.s32.totalorder %s117, %s118
      %p130 = scmp.eq.s32.totalorder %s24, 3
      %p131 = por %p129, %p130
      %p133 = scmp.ne.s32.totalorder %s118, %s132
      %p134 = scmp.eq.s32.totalorder %s24, 0
      %p135 = por %p133, %p134
      %s136 = ssub.s32 %s18, %s25
      %p137 = scmp.eq.s32.totalorder %s136, 0
      %s139 = sadd.s32 %s138, 1
      %s140 = scalar_select %p137, %s138, %s139
      %p143 = pneg %p137
      %p144 = scmp.eq.s32.totalorder %s18, 3
      %p145 = por %p143, %p144
      %p146 = scmp.ne.s32.totalorder %s138, %s141
      %p147 = scmp.eq.s32.totalorder %s18, 0
      %p148 = por %p146, %p147
      %p149 = scmp.ne.s32.totalorder %s138, %s141
      %p150 = scmp.eq.s32.totalorder %s23, 3
      %p151 = por %p149, %p150
      %p152 = scmp.ne.s32.totalorder %s141, %s142
      %p153 = scmp.eq.s32.totalorder %s23, 0
      %p154 = por %p152, %p153
      %p155 = scmp.ne.s32.totalorder %s141, %s142
      %p156 = scmp.eq.s32.totalorder %s24, 3
      %p157 = por %p155, %p156
      %p159 = scmp.ne.s32.totalorder %s142, %s158
      %p160 = scmp.eq.s32.totalorder %s24, 0
      %p161 = por %p159, %p160
      %p162 = scmp.le.s32.totalorder 1, %s18
      %p163 = scmp.lt.s32.totalorder %s18, 5
      %p164 = pnand %p162, %p163
      %p165 = pneg %p164
      // Predicated region
      $region9: #{tpu_custom_call.1} parent=5 // pred_check
        _
      $region10: #{tpu_custom_call.1} parent=5 // pred_check_branch
        %167 = sbr.rel (%p164) target = $region12
      $region11: #{tpu_custom_call.1} parent=5 // pred_region
        %s168 = ssub.s32 %s18, 1
        // Predicated region
        $region13: #{tpu_custom_call.1} parent=11 // pred_check
          %p169 = pneg %p65
        $region14: #{tpu_custom_call.1} parent=11 // pred_check_branch
          %171 = sbr.rel (%p169) target = $region16
        $region15: #{tpu_custom_call.1} parent=11 // pred_region
          %s173 = ssub.s32 4096, 4096
          %174 = vsyncadd [#allocation6], %s173
          %s175 = sshll.u32 [#allocation5], 4
          %s176 = int_to_ptr.vmem [resolvable:$true] %s175
          %181 = dma.hbm_to_vmem [thread:$0]  %s1, 4096, %s176, [#allocation6], 256, 256, 16
        $region16: #{tpu_custom_call.1} parent=11 // pred_fallthru
          _
        // Predicated region
        $region17: #{tpu_custom_call.1} parent=11 // pred_check
          %p182 = pneg %p86
        $region18: #{tpu_custom_call.1} parent=11 // pred_check_branch
          %184 = sbr.rel (%p182) target = $region20
        $region19: #{tpu_custom_call.1} parent=11 // pred_region
          _
        $region20: #{tpu_custom_call.1} parent=11 // pred_fallthru
          _
        // Predicated region
        $region21: #{tpu_custom_call.1} parent=11 // pred_check
          %p185 = pneg %p107
        $region22: #{tpu_custom_call.1} parent=11 // pred_check_branch
          %187 = sbr.rel (%p185) target = $region24
        $region23: #{tpu_custom_call.1} parent=11 // pred_region
          %s189 = ssub.s32 4096, 4096
          %190 = vsyncadd [#allocation6], %s189
          %s191 = sshll.u32 [#allocation7], 4
          %s192 = int_to_ptr.vmem [resolvable:$true] %s191
          %197 = dma.hbm_to_vmem [thread:$0]  %s3, 4096, %s192, [#allocation6], 128, 128, 8
        $region24: #{tpu_custom_call.1} parent=11 // pred_fallthru
          _
        // Predicated region
        $region25: #{tpu_custom_call.1} parent=11 // pred_check
          %p198 = pneg %p128
        $region26: #{tpu_custom_call.1} parent=11 // pred_check_branch
          %200 = sbr.rel (%p198) target = $region28
        $region27: #{tpu_custom_call.1} parent=11 // pred_region
          _
        $region28: #{tpu_custom_call.1} parent=11 // pred_fallthru
          _
      $region12: #{tpu_custom_call.1} parent=5 // pred_fallthru
        _
      %p201 = scmp.lt.s32.totalorder %s18, 4
      // Predicated region
      $region29: #{tpu_custom_call.1} parent=5 // pred_check
        %p202 = pneg %p201
      $region30: #{tpu_custom_call.1} parent=5 // pred_check_branch
        %204 = sbr.rel (%p202) target = $region32
      $region31: #{tpu_custom_call.1} parent=5 // pred_region
        // Predicated region
        $region33: #{tpu_custom_call.1} parent=31 // pred_check
          %p205 = pneg %p38
        $region34: #{tpu_custom_call.1} parent=31 // pred_check_branch
          %207 = sbr.rel (%p205) target = $region36
        $region35: #{tpu_custom_call.1} parent=31 // pred_region
          %s208 = sand.u32 %s28, 1
          %s209 = scalar_lea.sflag [#allocation3], %s208
          %s210 = sand.u32 %s28, 1
          %s211 = smul.addr %s210, 16
          %s212 = scalar_lea.vmem [#allocation2], %s211
          %s213 = smul.u32 2, %s18
          %s215 = ssub.s32 256, 256
          %216 = vsyncadd %s209, %s215
          %s217 = smul.addr %s213, 128
          %s218 = scalar_lea.hbm %s0, %s217
          %s219 = sshll.u32 %s212, 4
          %s220 = int_to_ptr.vmem [resolvable:$true] %s219
          %225 = dma.hbm_to_vmem [thread:$0]  %s218, 256, %s220, %s209, 128, 128, 8
        $region36: #{tpu_custom_call.1} parent=31 // pred_fallthru
          _
      $region32: #{tpu_custom_call.1} parent=5 // pred_fallthru
        _
      %p226 = scmp.le.s32.totalorder 1, %s18
      %p227 = scmp.lt.s32.totalorder %s18, 5
      %p228 = pnand %p226, %p227
      %p229 = pneg %p228
      // Predicated region
      $region37: #{tpu_custom_call.1} parent=5 // pred_check
        _
      $region38: #{tpu_custom_call.1} parent=5 // pred_check_branch
        %231 = sbr.rel (%p228) target = $region40
      $region39: #{tpu_custom_call.1} parent=5 // pred_region
        %s232 = ssub.s32 %s18, 1
        %s233 = sand.u32 %s31, 1
        %s234 = scalar_lea.sflag [#allocation3], %s233
        %s235 = sand.u32 %s31, 1
        %s236 = smul.addr %s235, 16
        %s237 = scalar_lea.vmem [#allocation2], %s236
        // Predicated region
        $region41: #{tpu_custom_call.1} parent=39 // pred_check
          %p238 = pneg %p44
        $region42: #{tpu_custom_call.1} parent=39 // pred_check_branch
          %240 = sbr.rel (%p238) target = $region44
        $region43: #{tpu_custom_call.1} parent=39 // pred_region
          %241 = dma.done %s234, 256
        $region44: #{tpu_custom_call.1} parent=39 // pred_fallthru
          _
        // Predicated region
        $region45: #{tpu_custom_call.1} parent=39 // pred_check
          %p242 = pneg %p65
        $region46: #{tpu_custom_call.1} parent=39 // pred_check_branch
          %244 = sbr.rel (%p242) target = $region48
        $region47: #{tpu_custom_call.1} parent=39 // pred_region
          %245 = dma.done [#allocation6], 4096
        $region48: #{tpu_custom_call.1} parent=39 // pred_fallthru
          _
        // Predicated region
        $region49: #{tpu_custom_call.1} parent=39 // pred_check
          %p246 = pneg %p107
        $region50: #{tpu_custom_call.1} parent=39 // pred_check_branch
          %248 = sbr.rel (%p246) target = $region52
        $region51: #{tpu_custom_call.1} parent=39 // pred_region
          %249 = dma.done [#allocation6], 4096
        $region52: #{tpu_custom_call.1} parent=39 // pred_fallthru
          _
        %s250 = sand.u32 %s31, 1
        %s251 = scalar_lea.sflag [#allocation3], %s250
        %s252 = sand.u32 %s31, 1
        %s253 = smul.addr %s252, 16
        %s254 = scalar_lea.vmem [#allocation2], %s253
        %p255 = pneg %p44
        %p256 = pneg %p41
        %p257 = pneg %p65
        %p258 = pneg %p62
        %p259 = pneg %p86
        %p260 = pneg %p83
        %p261 = pneg %p107
        %p262 = pneg %p104
        %p263 = pneg %p128
        %p264 = pneg %p125
        %p265 = pneg %p154
        %p266 = pneg %p151
        %s267 = sand.u32 %s141, 1
        %s268 = scalar_lea.sflag [#allocation4], %s267
        %s269 = sand.u32 %s141, 1
        %s270 = smul.addr %s269, 16
        %s271 = scalar_lea.vmem [#allocation8], %s270
        %s272 = smul.u32 2, %s23
        %s273 = smul.u32 2, %s23
        %v274 = vld [vmem:[%s237] sm:$0xff]
        %v275 = vld [vmem:[%s237 + $0x8] sm:$0xff]
        %v276 = vld [vmem:[#allocation5] sm:$0xff]
        %v277 = vld [vmem:[#allocation5 + $0x8] sm:$0xff]
        %v278 = vld [vmem:[#allocation5 + $0x10] sm:$0xff]
        %v279 = vld [vmem:[#allocation5 + $0x18] sm:$0xff]
        %v280 = vld [vmem:[#allocation5 + $0x20] sm:$0xff]
        %v281 = vld [vmem:[#allocation5 + $0x28] sm:$0xff]
        %v282 = vld [vmem:[#allocation5 + $0x30] sm:$0xff]
        %v283 = vld [vmem:[#allocation5 + $0x38] sm:$0xff]
        %v284 = vld [vmem:[#allocation5 + $0x40] sm:$0xff]
        %v285 = vld [vmem:[#allocation5 + $0x48] sm:$0xff]
        %v286 = vld [vmem:[#allocation5 + $0x50] sm:$0xff]
        %v287 = vld [vmem:[#allocation5 + $0x58] sm:$0xff]
        %v288 = vld [vmem:[#allocation5 + $0x60] sm:$0xff]
        %v289 = vld [vmem:[#allocation5 + $0x68] sm:$0xff]
        %v290 = vld [vmem:[#allocation5 + $0x70] sm:$0xff]
        %v291 = vld [vmem:[#allocation5 + $0x78] sm:$0xff]
        %v292 = vld [vmem:[#allocation5 + $0x80] sm:$0xff]
        %v293 = vld [vmem:[#allocation5 + $0x88] sm:$0xff]
        %v294 = vld [vmem:[#allocation5 + $0x90] sm:$0xff]
        %v295 = vld [vmem:[#allocation5 + $0x98] sm:$0xff]
        %v296 = vld [vmem:[#allocation5 + $0xa0] sm:$0xff]
        %v297 = vld [vmem:[#allocation5 + $0xa8] sm:$0xff]
        %v298 = vld [vmem:[#allocation5 + $0xb0] sm:$0xff]
        %v299 = vld [vmem:[#allocation5 + $0xb8] sm:$0xff]
        %v300 = vld [vmem:[#allocation5 + $0xc0] sm:$0xff]
        %v301 = vld [vmem:[#allocation5 + $0xc8] sm:$0xff]
        %v302 = vld [vmem:[#allocation5 + $0xd0] sm:$0xff]
        %v303 = vld [vmem:[#allocation5 + $0xd8] sm:$0xff]
        %v304 = vld [vmem:[#allocation5 + $0xe0] sm:$0xff]
        %v305 = vld [vmem:[#allocation5 + $0xe8] sm:$0xff]
        %v306 = vld [vmem:[#allocation5 + $0xf0] sm:$0xff]
        %v307 = vld [vmem:[#allocation5 + $0xf8] sm:$0xff]
        %v308 = vld [vmem:[%s2] sm:$0x3]
        %v310 = vlaneseq
        %v311 = vshrl.u32 %v310, 7
        %v312 = vsub.s32 0, %v311
        %v313 = vrot.slane %v308, %v312
        %v314 = vlaneseq
        %v315 = vshrl.u32 %v314, 7
        %v316 = vsub.s32 1, %v315
        %v317 = vrot.slane %v308, %v316
        %320 = vmatprep.subr.mxu0 %v307
        %321 = vmatpush1.msra.mxu0 %v306
        %322 = vmatprep.subr.mxu0 %v305
        %323 = vmatpush1.msra.mxu0 %v304
        %324 = vmatprep.subr.mxu0 %v303
        %325 = vmatpush1.msra.mxu0 %v302
        %326 = vmatprep.subr.mxu0 %v301
        %327 = vmatpush1.msra.mxu0 %v300
        %328 = vmatprep.subr.mxu0 %v299
        %329 = vmatpush1.msra.mxu0 %v298
        %330 = vmatprep.subr.mxu0 %v297
        %331 = vmatpush1.msra.mxu0 %v296
        %332 = vmatprep.subr.mxu0 %v295
        %333 = vmatpush1.msra.mxu0 %v294
        %334 = vmatprep.subr.mxu0 %v293
        %335 = vmatpush1.msra.mxu0 %v292
        %336 = vmatprep.subr.mxu0 %v291
        %337 = vmatpush1.msra.mxu0 %v290
        %338 = vmatprep.subr.mxu0 %v289
        %339 = vmatpush1.msra.mxu0 %v288
        %340 = vmatprep.subr.mxu0 %v287
        %341 = vmatpush1.msra.mxu0 %v286
        %342 = vmatprep.subr.mxu0 %v285
        %343 = vmatpush1.msra.mxu0 %v284
        %344 = vmatprep.subr.mxu0 %v283
        %345 = vmatpush1.msra.mxu0 %v282
        %346 = vmatprep.subr.mxu0 %v281
        %347 = vmatpush1.msra.mxu0 %v280
        %348 = vmatprep.subr.mxu0 %v279
        %349 = vmatpush1.msra.mxu0 %v278
        %350 = vmatprep.subr.mxu0 %v277
        %351 = vmatpush1.msra.mxu0 %v276
        %352 = vmatprep.subr.mxu0 0.0
        %353 = vmatpush2.msra.mxu0 0.0
        %354 = vmatprep.subr.mxu0 0.0
        %355 = vmatpush2.msra.mxu0 0.0
        %356 = vmatprep.subr.mxu0 0.0
        %357 = vmatpush2.msra.mxu0 0.0
        %358 = vmatprep.subr.mxu0 0.0
        %359 = vmatpush2.msra.mxu0 0.0
        %360 = vmatprep.subr.mxu0 0.0
        %361 = vmatpush2.msra.mxu0 0.0
        %362 = vmatprep.subr.mxu0 0.0
        %363 = vmatpush2.msra.mxu0 0.0
        %364 = vmatprep.subr.mxu0 0.0
        %365 = vmatpush2.msra.mxu0 0.0
        %366 = vmatprep.subr.mxu0 0.0
        %367 = vmatpush2.msra.mxu0 0.0
        %368 = vmatprep.subr.mxu0 0.0
        %369 = vmatpush2.msra.mxu0 0.0
        %370 = vmatprep.subr.mxu0 0.0
        %371 = vmatpush2.msra.mxu0 0.0
        %372 = vmatprep.subr.mxu0 0.0
        %373 = vmatpush2.msra.mxu0 0.0
        %374 = vmatprep.subr.mxu0 0.0
        %375 = vmatpush2.msra.mxu0 0.0
        %376 = vmatprep.subr.mxu0 0.0
        %377 = vmatpush2.msra.mxu0 0.0
        %378 = vmatprep.subr.mxu0 0.0
        %379 = vmatpush2.msra.mxu0 0.0
        %380 = vmatprep.subr.mxu0 0.0
        %381 = vmatpush2.msra.mxu0 0.0
        %382 = vmatprep.subr.mxu0 0.0
        %383 = vmatpush2.msra.mxu0 0.0
        %384 = vmatprep.mubr.f32.mxu0 0.0
        %385 = vmatmul.mubr.f32.gmra.mxu0 %v274
        %v386 = vpop.f32.mrf.mxu0
        %v387 = vadd.f32 %v313, %v386
        %v388 = vpop.f32.mrf.mxu0
        %v389 = vadd.f32 %v317, %v388
        %390 = vmatprep.mubr.f32.mxu0 0.0
        %391 = vmatmul.mubr.f32.gmra.mxu0 %v275
        %v392 = vpop.f32.mrf.mxu0
        %v393 = vadd.f32 %v313, %v392
        %v394 = vpop.f32.mrf.mxu0
        %v395 = vadd.f32 %v317, %v394
        %396 = vdwg.mxu0
        %v397 = vmax.f32 %v387, 0.0
        %v398 = vmax.f32 %v389, 0.0
        %v399 = vmax.f32 %v393, 0.0
        %v400 = vmax.f32 %v395, 0.0
        %v401 = vld [vmem:[#allocation7] sm:$0xff]
        %v402 = vld [vmem:[#allocation7 + $0x8] sm:$0xff]
        %v403 = vld [vmem:[#allocation7 + $0x10] sm:$0xff]
        %v404 = vld [vmem:[#allocation7 + $0x18] sm:$0xff]
        %v405 = vld [vmem:[#allocation7 + $0x20] sm:$0xff]
        %v406 = vld [vmem:[#allocation7 + $0x28] sm:$0xff]
        %v407 = vld [vmem:[#allocation7 + $0x30] sm:$0xff]
        %v408 = vld [vmem:[#allocation7 + $0x38] sm:$0xff]
        %v409 = vld [vmem:[#allocation7 + $0x40] sm:$0xff]
        %v410 = vld [vmem:[#allocation7 + $0x48] sm:$0xff]
        %v411 = vld [vmem:[#allocation7 + $0x50] sm:$0xff]
        %v412 = vld [vmem:[#allocation7 + $0x58] sm:$0xff]
        %v413 = vld [vmem:[#allocation7 + $0x60] sm:$0xff]
        %v414 = vld [vmem:[#allocation7 + $0x68] sm:$0xff]
        %v415 = vld [vmem:[#allocation7 + $0x70] sm:$0xff]
        %v416 = vld [vmem:[#allocation7 + $0x78] sm:$0xff]
        %v417 = vld [vmem:[#allocation7 + $0x80] sm:$0xff]
        %v418 = vld [vmem:[#allocation7 + $0x88] sm:$0xff]
        %v419 = vld [vmem:[#allocation7 + $0x90] sm:$0xff]
        %v420 = vld [vmem:[#allocation7 + $0x98] sm:$0xff]
        %v421 = vld [vmem:[#allocation7 + $0xa0] sm:$0xff]
        %v422 = vld [vmem:[#allocation7 + $0xa8] sm:$0xff]
        %v423 = vld [vmem:[#allocation7 + $0xb0] sm:$0xff]
        %v424 = vld [vmem:[#allocation7 + $0xb8] sm:$0xff]
        %v425 = vld [vmem:[#allocation7 + $0xc0] sm:$0xff]
        %v426 = vld [vmem:[#allocation7 + $0xc8] sm:$0xff]
        %v427 = vld [vmem:[#allocation7 + $0xd0] sm:$0xff]
        %v428 = vld [vmem:[#allocation7 + $0xd8] sm:$0xff]
        %v429 = vld [vmem:[#allocation7 + $0xe0] sm:$0xff]
        %v430 = vld [vmem:[#allocation7 + $0xe8] sm:$0xff]
        %v431 = vld [vmem:[#allocation7 + $0xf0] sm:$0xff]
        %v432 = vld [vmem:[#allocation7 + $0xf8] sm:$0xff]
        %v433 = vld [vmem:[%s4] sm:$0x1]
        %v435 = vlaneseq
        %v436 = vshrl.u32 %v435, 7
        %v437 = vsub.s32 0, %v436
        %v438 = vrot.slane %v433, %v437
        %440 = vmatprep.subr.mxu0 0.0
        %441 = vmatpush1.msra.mxu0 %v416
        %442 = vmatprep.subr.mxu0 0.0
        %443 = vmatpush1.msra.mxu0 %v415
        %444 = vmatprep.subr.mxu0 0.0
        %445 = vmatpush1.msra.mxu0 %v414
        %446 = vmatprep.subr.mxu0 0.0
        %447 = vmatpush1.msra.mxu0 %v413
        %448 = vmatprep.subr.mxu0 0.0
        %449 = vmatpush1.msra.mxu0 %v412
        %450 = vmatprep.subr.mxu0 0.0
        %451 = vmatpush1.msra.mxu0 %v411
        %452 = vmatprep.subr.mxu0 0.0
        %453 = vmatpush1.msra.mxu0 %v410
        %454 = vmatprep.subr.mxu0 0.0
        %455 = vmatpush1.msra.mxu0 %v409
        %456 = vmatprep.subr.mxu0 0.0
        %457 = vmatpush1.msra.mxu0 %v408
        %458 = vmatprep.subr.mxu0 0.0
        %459 = vmatpush1.msra.mxu0 %v407
        %460 = vmatprep.subr.mxu0 0.0
        %461 = vmatpush1.msra.mxu0 %v406
        %462 = vmatprep.subr.mxu0 0.0
        %463 = vmatpush1.msra.mxu0 %v405
        %464 = vmatprep.subr.mxu0 0.0
        %465 = vmatpush1.msra.mxu0 %v404
        %466 = vmatprep.subr.mxu0 0.0
        %467 = vmatpush1.msra.mxu0 %v403
        %468 = vmatprep.subr.mxu0 0.0
        %469 = vmatpush1.msra.mxu0 %v402
        %470 = vmatprep.subr.mxu0 0.0
        %471 = vmatpush1.msra.mxu0 %v401
        %472 = vmatprep.subr.mxu0 0.0
        %473 = vmatpush2.msra.mxu0 %v432
        %474 = vmatprep.subr.mxu0 0.0
        %475 = vmatpush2.msra.mxu0 %v431
        %476 = vmatprep.subr.mxu0 0.0
        %477 = vmatpush2.msra.mxu0 %v430
        %478 = vmatprep.subr.mxu0 0.0
        %479 = vmatpush2.msra.mxu0 %v429
        %480 = vmatprep.subr.mxu0 0.0
        %481 = vmatpush2.msra.mxu0 %v428
        %482 = vmatprep.subr.mxu0 0.0
        %483 = vmatpush2.msra.mxu0 %v427
        %484 = vmatprep.subr.mxu0 0.0
        %485 = vmatpush2.msra.mxu0 %v426
        %486 = vmatprep.subr.mxu0 0.0
        %487 = vmatpush2.msra.mxu0 %v425
        %488 = vmatprep.subr.mxu0 0.0
        %489 = vmatpush2.msra.mxu0 %v424
        %490 = vmatprep.subr.mxu0 0.0
        %491 = vmatpush2.msra.mxu0 %v423
        %492 = vmatprep.subr.mxu0 0.0
        %493 = vmatpush2.msra.mxu0 %v422
        %494 = vmatprep.subr.mxu0 0.0
        %495 = vmatpush2.msra.mxu0 %v421
        %496 = vmatprep.subr.mxu0 0.0
        %497 = vmatpush2.msra.mxu0 %v420
        %498 = vmatprep.subr.mxu0 0.0
        %499 = vmatpush2.msra.mxu0 %v419
        %500 = vmatprep.subr.mxu0 0.0
        %501 = vmatpush2.msra.mxu0 %v418
        %502 = vmatprep.subr.mxu0 0.0
        %503 = vmatpush2.msra.mxu0 %v417
        %504 = vmatprep.mubr.f32.mxu0 %v398
        %505 = vmatmul.mubr.f32.gmra.mxu0 %v397
        %v506 = vpop.f32.mrf.mxu0
        %v507 = vadd.f32 %v438, %v506
        %v508 = vpop.f32.mrf.mxu0
        %509 = vmatprep.mubr.f32.mxu0 %v400
        %510 = vmatmul.mubr.f32.gmra.mxu0 %v399
        %v511 = vpop.f32.mrf.mxu0
        %v512 = vadd.f32 %v438, %v511
        %v513 = vpop.f32.mrf.mxu0
        %514 = vdwg.mxu0
        %v515 = vmax.f32 %v507, 0.0
        %v516 = vmax.f32 %v512, 0.0
        %517 = vst [vmem:[%s271] sm:$0xff] %v515
        %518 = vst [vmem:[%s271 + $0x8] sm:$0xff] %v516
        %s519 = sand.u32 %s141, 1
        %s520 = scalar_lea.sflag [#allocation4], %s519
        %s521 = sand.u32 %s141, 1
        %s522 = smul.addr %s521, 16
        %s523 = scalar_lea.vmem [#allocation8], %s522
        // Predicated region
        $region53: #{tpu_custom_call.1} parent=39 // pred_check
          %p524 = pneg %p151
        $region54: #{tpu_custom_call.1} parent=39 // pred_check_branch
          %526 = sbr.rel (%p524) target = $region56
        $region55: #{tpu_custom_call.1} parent=39 // pred_region
          %s527 = smul.u32 2, %s23
          %s529 = ssub.s32 256, 256
          %530 = vsyncadd %s520, %s529
          %s531 = smul.addr %s527, 128
          %s532 = scalar_lea.hbm %s5, %s531
          %s533 = sshll.u32 %s523, 4
          %s534 = int_to_ptr.vmem [resolvable:$true] %s533
          %539 = dma.vmem_to_hbm [thread:$0]  %s534, 256, %s532, %s520, 128, 128, 8
        $region56: #{tpu_custom_call.1} parent=39 // pred_fallthru
          _
      $region40: #{tpu_custom_call.1} parent=5 // pred_fallthru
        _
      %p540 = scmp.le.s32.totalorder 2, %s18
      // Predicated region
      $region57: #{tpu_custom_call.1} parent=5 // pred_check
        %p541 = pneg %p540
      $region58: #{tpu_custom_call.1} parent=5 // pred_check_branch
        %543 = sbr.rel (%p541) target = $region60
      $region59: #{tpu_custom_call.1} parent=5 // pred_region
        %s544 = ssub.s32 %s18, 2
        // Predicated region
        $region61: #{tpu_custom_call.1} parent=59 // pred_check
          %p545 = pneg %p157
        $region62: #{tpu_custom_call.1} parent=59 // pred_check_branch
          %547 = sbr.rel (%p545) target = $region64
        $region63: #{tpu_custom_call.1} parent=59 // pred_region
          %s548 = sand.u32 %s142, 1
          %s549 = scalar_lea.sflag [#allocation4], %s548
          %s550 = sand.u32 %s142, 1
          %s551 = smul.addr %s550, 16
          %s552 = scalar_lea.vmem [#allocation8], %s551
          %553 = dma.done %s549, 256
        $region64: #{tpu_custom_call.1} parent=59 // pred_fallthru
          _
      $region60: #{tpu_custom_call.1} parent=5 // pred_fallthru
        _
    $region6: #{tpu_custom_call.1} parent=1 // loop_footer
      %s22 = sadd.s32 1, %s18
    $region7: #{tpu_custom_call.1} parent=1 // loop_footer_branch
      %17 = sbr.rel target = $region3
    $region8: #{tpu_custom_call.1} parent=1 // loop_exit
      _
    %554 = vsyncpa [#allocation3], 1
    %s555 = scalar_lea.sflag [#allocation3], 1
    %556 = vsyncpa %s555, 1
    %557 = vsyncpa [#allocation6], 1
    %558 = vsyncpa [#allocation4], 1
    %s559 = scalar_lea.sflag [#allocation4], 1
    %560 = vsyncpa %s559, 1

</llo_original>
